<compile_context>
chip_gen: v5e
topology: v5e:2x2
jax: 0.10.0
libtpu: 0.0.40
codegen_flags: <defaults>
</compile_context>

<pallas_src>
import functools

import jax
import jax.numpy as jnp
from jax.experimental import pallas as pl
from jax.experimental.pallas import tpu as pltpu

# ---------------------------------------------------------------------------
# Logical (PyTorch-equivalent) hyper-parameters.
# ---------------------------------------------------------------------------
B, C_IN, H, W = 2, 4, 16, 16        # input NCHW
K = 4                               # stem patch size / stride (patchify stem)
P = (H // K) * (W // K)             # patches per image = 16
CKK = C_IN * K * K                  # flattened patch length = 64
C_STEM = 32                         # stem output channels
D_EMB = 32                          # encoder embedding dim
N_CLS = 2                           # nn.Linear classifier output classes

# Lane-padded dims (every matmul operand / output last dim is a multiple of 128).
LANE = 128
CKK_P = 128
D_EMB_P = 128
N_CLS_P = 128
W_COLS = 2 * LANE                   # packed slab columns: [W_emb | W_cls]

# Row-tile axis.  scale_features normalizes over the whole batch, so the full batch
# must live in one tile; with B=2 that is trivially true (grid degenerates to 1 step).
BATCH_TILE = B
ROWS = BATCH_TILE * P               # 32 patch rows per grid step (multiple of 8)
OUT_ROWS = 8                        # sublane-padded output rows per grid step


# ---------------------------------------------------------------------------
# Pallas kernel: whole forward pass, VMEM-resident, two MXU matmuls.
# ---------------------------------------------------------------------------
def _assembled_classifier_kernel(
    patches_ref,   # (ROWS, CKK_P)   bf16: real lanes [0,CKK), lane CKK == 1.0, rest 0
    w_ref,         # (CKK_P, W_COLS) bf16: cols [0,128)=fused embed, [128,256)=classifier
    out_ref,       # (OUT_ROWS, N_CLS_P) f32
    *,
    scale_features: bool,
):
    # Static 128-lane column slices of the single packed weight slab (one DMA).
    w_emb = w_ref[:, pl.ds(0, LANE)]       # rows<CKK: W_stem@W_enc; row CKK: fused bias
    w_cls = w_ref[:, pl.ds(LANE, LANE)]    # rows<D_EMB: W_cls;      row D_EMB: b_cls

    lane = jax.lax.broadcasted_iota(jnp.int32, (1, D_EMB_P), 1)

    # --- backbone.stem + encoder GAP, with the pool hoisted in front of the linear
    #     patchify stem:  mean_P(X) @ (Ws@We) + (bs@We + be).
    pooled = jnp.mean(
        patches_ref[...].astype(jnp.float32).reshape(BATCH_TILE, P, CKK_P), axis=1)
    # Lane CKK is a constant 1.0, so the fused bias row of w_emb comes out of the MXU.
    feat = jnp.dot(pooled.astype(jnp.bfloat16), w_emb,
                   preferred_element_type=jnp.float32)              # (B, 128) f32
    # TODO(synk): PyTorch nn.GELU defaults to exact erf; tanh approximation used here.
    feat = jax.nn.gelu(feat, approximate=True)

    # --- AssembledClassifier.scale_features: mean / std(unbiased=False) over dim=-2.
    if scale_features:
        m = jnp.mean(feat, axis=-2, keepdims=True)
        var = jnp.mean((feat - m) ** 2, axis=-2, keepdims=True)
        # Padded lanes are identically zero (var == 0); divide them by 1.0 so the
        # 0/0 NaN cannot reach the classifier matmul via NaN * 0.
        denom = jnp.where(lane < D_EMB, jnp.sqrt(var), 1.0)
        feat = (feat - m) / denom

    # --- classifier: lane D_EMB set to 1.0 so w_cls row D_EMB (= b_cls) folds into
    #     the matmul; padded output lanes stay zero.
    feat = jnp.where(lane == D_EMB, 1.0, feat)
    logits = jnp.dot(feat.astype(jnp.bfloat16), w_cls,
                     preferred_element_type=jnp.float32)            # (B, 128) f32

    # Sublane-padded, lane-dense output block; wrapper slices [:B, :N_CLS].
    out_ref[...] = jnp.zeros_like(out_ref)
    out_ref[0:BATCH_TILE, :] = logits


# ---------------------------------------------------------------------------
# Parameters (torch layouts), offline fusion / packing, patch extraction (glue).
# ---------------------------------------------------------------------------
def init_params(key):
    ks = jax.random.split(key, 6)
    # torch Conv2d weight (out_ch, in_ch, kh, kw) -> (out, in*kh*kw) -> transpose.
    w_stem_conv = 0.1 * jax.random.normal(ks[0], (C_STEM, C_IN, K, K), jnp.float32)
    return dict(
        w_stem=w_stem_conv.reshape(C_STEM, CKK).T,                  # (CKK, C_STEM)
        b_stem=0.1 * jax.random.normal(ks[1], (1, C_STEM), jnp.float32),
        w_enc=0.1 * jax.random.normal(ks[2], (C_STEM, D_EMB), jnp.float32),
        b_enc=0.1 * jax.random.normal(ks[3], (1, D_EMB), jnp.float32),
        w_cls=0.1 * jax.random.normal(ks[4], (D_EMB, N_CLS), jnp.float32),
        b_cls=0.1 * jax.random.normal(ks[5], (1, N_CLS), jnp.float32),
    )


def _fused_embed(params):
    # stem -> GAP -> encoder-linear is linear in the patches, so W_stem@W_enc and the
    # biases fuse offline (stand-in backbone only; the real ConvNeXt is nonlinear).
    w_emb = params["w_stem"] @ params["w_enc"]                      # (CKK, D_EMB)
    b_emb = params["b_stem"] @ params["w_enc"] + params["b_enc"]    # (1, D_EMB)
    return w_emb, b_emb


def pack_params(params):
    """One lane-dense bf16 slab (128, 256): cols [0,128) = fused embed weight with the
    fused bias in row CKK; cols [128,256) = classifier weight with b_cls in row D_EMB."""
    w_emb, b_emb = _fused_embed(params)
    slab = jnp.zeros((CKK_P, W_COLS), jnp.float32)
    slab = slab.at[:CKK, :D_EMB].set(w_emb)
    slab = slab.at[CKK, :D_EMB].set(b_emb[0])
    slab = slab.at[:D_EMB, LANE:LANE + N_CLS].set(params["w_cls"])
    slab = slab.at[D_EMB, LANE:LANE + N_CLS].set(params["b_cls"][0])
    return slab.astype(jnp.bfloat16)


def _extract_patches(x_nchw):
    # (B, C, H, W) -> (B*P, C*K*K), per-patch (C, kh, kw) ordering to match the
    # flattened torch Conv2d weight layout.
    x = x_nchw.reshape(B, C_IN, H // K, K, W // K, K)
    x = jnp.transpose(x, (0, 2, 4, 1, 3, 5))           # (B, Hp, Wp, C, K, K)
    return x.reshape(B * P, CKK)


def _extract_patches_padded(x_nchw):
    # Single producer: patchify transpose + bias lane (1.0 at lane CKK) + zero lane
    # padding + bf16 cast.  Under jit this is one fusion, and allow_input_fusion lets
    # XLA fuse it straight into the pallas_call input DMA (no extra HBM round trip).
    patches = _extract_patches(x_nchw)
    ones = jnp.ones((B * P, 1), patches.dtype)
    zeros = jnp.zeros((B * P, CKK_P - CKK - 1), patches.dtype)
    return jnp.concatenate([patches, ones, zeros], axis=1).astype(jnp.bfloat16)


@functools.partial(jax.jit, static_argnames=("scale_features",))
def assembled_classifier_forward(x_nchw, w_slab, *, scale_features=False):
    patches_p = _extract_patches_padded(x_nchw)
    kernel = functools.partial(_assembled_classifier_kernel,
                               scale_features=scale_features)
    out_padded = pl.pallas_call(
        kernel,
        # One step at B=2: the whole batch lives in one tile (required by
        # scale_features, which normalizes over the batch dimension).
        grid=(B // BATCH_TILE,),
        in_specs=[
            pl.BlockSpec((ROWS, CKK_P), lambda i: (i, 0)),
            pl.BlockSpec((CKK_P, W_COLS), lambda i: (0, 0)),
        ],
        out_specs=pl.BlockSpec((OUT_ROWS, N_CLS_P), lambda i: (i, 0)),
        out_shape=jax.ShapeDtypeStruct((OUT_ROWS, N_CLS_P), jnp.float32),
        compiler_params=pltpu.CompilerParams(
            dimension_semantics=("parallel",),
            allow_input_fusion=[True, False],   # fuse the patch producer, not the slab
        ),
    )(patches_p, w_slab)
    return out_padded[:B, :N_CLS]


# ---------------------------------------------------------------------------
# References.
# ---------------------------------------------------------------------------
def reference_forward(x_nchw, params, scale_features=False):
    """Pure-JAX reference with the kernel's exact numerics (pool-before-stem, fused
    stem/enc weights, bf16 MXU operands, f32 accumulation, tanh GELU)."""
    w_emb, b_emb = _fused_embed(params)
    w_emb = w_emb.astype(jnp.bfloat16)
    b_emb = b_emb.astype(jnp.bfloat16).astype(jnp.float32)
    w_cls = params["w_cls"].astype(jnp.bfloat16)
    b_cls = params["b_cls"].astype(jnp.bfloat16).astype(jnp.float32)

    patches = _extract_patches(x_nchw).astype(jnp.bfloat16)
    pooled = patches.astype(jnp.float32).reshape(B, P, CKK).mean(axis=1)
    feat = jnp.dot(pooled.astype(jnp.bfloat16), w_emb,
                   preferred_element_type=jnp.float32) + b_emb
    feat = jax.nn.gelu(feat, approximate=True)
    if scale_features:
        m = feat.mean(axis=-2, keepdims=True)
        s = jnp.sqrt(((feat - m) ** 2).mean(axis=-2, keepdims=True))
        feat = (feat - m) / s
    return jnp.dot(feat.astype(jnp.bfloat16), w_cls,
                   preferred_element_type=jnp.float32) + b_cls


def reference_forward_torch_order(x_nchw, params, scale_features=False):
    """Unfused f32 reference in the original module order (stem -> encoder -> [scale]
    -> classifier); validates the pool/weight-fusion rewrite is algebraically faithful."""
    patches = _extract_patches(x_nchw)
    stem = patches @ params["w_stem"] + params["b_stem"]
    pooled = stem.reshape(B, P, C_STEM).mean(axis=1)
    feat = jax.nn.gelu(pooled @ params["w_enc"] + params["b_enc"], approximate=True)
    if scale_features:
        m = feat.mean(axis=-2, keepdims=True)
        s = jnp.sqrt(((feat - m) ** 2).mean(axis=-2, keepdims=True))
        feat = (feat - m) / s
    return feat @ params["w_cls"] + params["b_cls"]


if __name__ == "__main__":
    key = jax.random.PRNGKey(0)
    k_x, k_p = jax.random.split(key)
    x = jax.random.normal(k_x, (B, C_IN, H, W), jnp.float32)
    params = init_params(k_p)
    w_slab = pack_params(params)

    for scale in (False, True):
        out = assembled_classifier_forward(x, w_slab, scale_features=scale)
        out = jax.block_until_ready(out)
        ref = reference_forward(x, params, scale_features=scale)
        assert out.shape == (B, N_CLS)
        assert bool(jnp.all(jnp.isfinite(out)))
        assert bool(jnp.allclose(out, ref, rtol=1e-2, atol=1e-2)), (out, ref)

    # Cross-check the fused rewrite against the original per-stage (f32) module order.
    # scale_features=False only: at B=2 the batch normalization collapses features to
    # exact signs, so a sub-1e-2 bf16 perturbation could legitimately flip one.
    out = assembled_classifier_forward(x, w_slab, scale_features=False)
    out = jax.block_until_ready(out)
    ref_f32 = reference_forward_torch_order(x, params, scale_features=False)
    assert bool(jnp.allclose(out, ref_f32, rtol=5e-2, atol=2e-2)), (out, ref_f32)

    print("KERNEL_OK")
</pallas_src>

<mosaic_0001>
module attributes {stable_mosaic.version = 11 : i64} {
  func.func @_assembled_classifier_kernel(%arg0: i32, %arg1: memref<32x128xbf16, #tpu.memory_space<vmem>>, %arg2: memref<128x256xbf16, #tpu.memory_space<vmem>>, %arg3: memref<8x128xf32, #tpu.memory_space<vmem>>) attributes {dimension_semantics = [#tpu.dimension_semantics<parallel>], iteration_bounds = array<i64: 1>, scalar_prefetch = 0 : i64, scratch_operands = 0 : i64, tpu.core_type = #tpu.core_type<tc>, window_params = [{transform_indices = @transform_0, window_bounds = array<i64: 32, 128>}, {pipeline_mode = #tpu.pipeline_mode<synchronous>, transform_indices = @transform_1, window_bounds = array<i64: 128, 256>}, {transform_indices = @transform_2, window_bounds = array<i64: 8, 128>}]} {
    %c0 = arith.constant 0 : index
    %c0_0 = arith.constant 0 : index
    %0 = vector.load %arg2[%c0, %c0_0] : memref<128x256xbf16, #tpu.memory_space<vmem>>, vector<128x128xbf16>
    %c0_1 = arith.constant 0 : index
    %c128 = arith.constant 128 : index
    %1 = vector.load %arg2[%c0_1, %c128] : memref<128x256xbf16, #tpu.memory_space<vmem>>, vector<128x128xbf16>
    %2 = tpu.iota {dimensions = array<i32: 1>} : vector<1x128xi32>
    %c0_2 = arith.constant 0 : index
    %c0_3 = arith.constant 0 : index
    %3 = vector.load %arg1[%c0_2, %c0_3] : memref<32x128xbf16, #tpu.memory_space<vmem>>, vector<32x128xbf16>
    %4 = arith.extf %3 : vector<32x128xbf16> to vector<32x128xf32>
    %5 = vector.shape_cast %4 : vector<32x128xf32> to vector<2x16x128xf32>
    %cst = arith.constant dense<0.000000e+00> : vector<2x128xf32>
    %6 = vector.multi_reduction <add>, %5, %cst [1] : vector<2x16x128xf32> to vector<2x128xf32>
    %cst_4 = arith.constant 1.600000e+01 : f32
    %7 = vector.broadcast %cst_4 : f32 to vector<2x128xf32>
    %8 = arith.divf %6, %7 : vector<2x128xf32>
    %9 = arith.truncf %8 : vector<2x128xf32> to vector<2x128xbf16>
    %cst_5 = arith.constant dense<0.000000e+00> : vector<2x128xf32>
    %10 = tpu.matmul %9, %0, %cst_5 {dimension_numbers = #tpu.dot_dimension_numbers<[1], [0], [0], [1], [0, 0, 1, 1], [], []>} : vector<2x128xbf16>, vector<128x128xbf16>, vector<2x128xf32> -> vector<2x128xf32>
    %11 = arith.mulf %10, %10 : vector<2x128xf32>
    %12 = arith.mulf %10, %11 : vector<2x128xf32>
    %cst_6 = arith.constant 4.471500e-02 : f32
    %13 = vector.broadcast %cst_6 : f32 to vector<2x128xf32>
    %14 = arith.mulf %13, %12 : vector<2x128xf32>
    %15 = arith.addf %10, %14 : vector<2x128xf32>
    %cst_7 = arith.constant 0.797884583 : f32
    %16 = vector.broadcast %cst_7 : f32 to vector<2x128xf32>
    %17 = arith.mulf %16, %15 : vector<2x128xf32>
    %18 = math.tanh %17 : vector<2x128xf32>
    %cst_8 = arith.constant 1.000000e+00 : f32
    %19 = vector.broadcast %cst_8 : f32 to vector<2x128xf32>
    %20 = arith.addf %19, %18 : vector<2x128xf32>
    %cst_9 = arith.constant 5.000000e-01 : f32
    %21 = vector.broadcast %cst_9 : f32 to vector<2x128xf32>
    %22 = arith.mulf %21, %20 : vector<2x128xf32>
    %23 = arith.mulf %10, %22 : vector<2x128xf32>
    %c32_i32 = arith.constant 32 : i32
    %24 = vector.broadcast %c32_i32 : i32 to vector<1x128xi32>
    %25 = arith.cmpi eq, %2, %24 : vector<1x128xi32>
    %cst_10 = arith.constant 1.000000e+00 : f32
    %26 = vector.shape_cast %25 : vector<1x128xi1> to vector<1x128xi1>
    %27 = vector.broadcast %26 : vector<1x128xi1> to vector<2x128xi1>
    %28 = vector.broadcast %cst_10 : f32 to vector<2x128xf32>
    %29 = arith.select %27, %28, %23 : vector<2x128xi1>, vector<2x128xf32>
    %30 = arith.truncf %29 : vector<2x128xf32> to vector<2x128xbf16>
    %cst_11 = arith.constant dense<0.000000e+00> : vector<2x128xf32>
    %31 = tpu.matmul %30, %1, %cst_11 {dimension_numbers = #tpu.dot_dimension_numbers<[1], [0], [0], [1], [0, 0, 1, 1], [], []>} : vector<2x128xbf16>, vector<128x128xbf16>, vector<2x128xf32> -> vector<2x128xf32>
    %cst_12 = arith.constant 0.000000e+00 : f32
    %32 = vector.broadcast %cst_12 : f32 to vector<8x128xf32>
    %c0_13 = arith.constant 0 : index
    %c0_14 = arith.constant 0 : index
    %33 = vector.load %arg3[%c0_13, %c0_14] : memref<8x128xf32, #tpu.memory_space<vmem>>, vector<8x128xf32>
    tpu.vector_store %arg3[%c0_13, %c0_14], %32 {strides = array<i32>} : memref<8x128xf32, #tpu.memory_space<vmem>>, vector<8x128xf32>,
    %c0_15 = arith.constant 0 : index
    %c0_16 = arith.constant 0 : index
    %34 = vector.load %arg3[%c0_15, %c0_16] : memref<8x128xf32, #tpu.memory_space<vmem>>, vector<2x128xf32>
    tpu.vector_store %arg3[%c0_15, %c0_16], %31 {strides = array<i32>} : memref<8x128xf32, #tpu.memory_space<vmem>>, vector<2x128xf32>,
    return
  }
  func.func @transform_0(%arg0: i32) -> (i32, i32) {
    %c0_i32 = arith.constant 0 : i32
    %c0_i32_0 = arith.constant 0 : i32
    return %arg0, %c0_i32 : i32, i32
  }
  func.func @transform_1(%arg0: i32) -> (i32, i32) {
    %c0_i32 = arith.constant 0 : i32
    %c0_i32_0 = arith.constant 0 : i32
    %c0_i32_1 = arith.constant 0 : i32
    return %c0_i32, %c0_i32_0 : i32, i32
  }
  func.func @transform_2(%arg0: i32) -> (i32, i32) {
    %c0_i32 = arith.constant 0 : i32
    %c0_i32_0 = arith.constant 0 : i32
    return %arg0, %c0_i32 : i32, i32
  }
}

</mosaic_0001>

<llo_original>
// kernel: assembled_classifier_forward.2
$region0: #{assembled_classifier_forward.2}
  #allocation0 [shape = 'u32[]', space=smem, size = 0x4, offset = 0x4, fixed_abs, tag = 'smem constant byte address 0x4 - core index']
  #allocation1 [shape = 'u32[72,128]{1,0:T(1,128)}', space=vmem, size = 0x9000, scoped, tag = 'internal scratch']
  #allocation2 [shape = 'u32[2048]{0}', space=vmem, size = 0x2000, scoped, tag = 'scoped memory for assembled_classifier_forward.2']
  #allocation3 [shape = 'u32[2048]{0}', space=vmem, size = 0x2000, scoped, tag = 'scoped memory for assembled_classifier_forward.2']
  #allocation4 [shape = 'u32[2048]{0}', space=vmem, size = 0x2000, scoped, tag = 'scoped memory for assembled_classifier_forward.2']
  #allocation5 [shape = 'u32[2048]{0}', space=vmem, size = 0x2000, scoped, tag = 'scoped memory for assembled_classifier_forward.2']
  #allocation6 [shape = 'u32[2048]{0}', space=vmem, size = 0x2000, scoped, tag = 'scoped memory for assembled_classifier_forward.2']
  %s0 = inlined_call_operand.vmem [shape: bf16[128,256], index: 0, kind: input, shape index: {}]
  %s1 = inlined_call_operand.vmem [shape: bf16[32,64], index: 1, kind: input, shape index: {}]
  %s2 = inlined_call_operand.<no memory space> [shape: bf16[], index: 2, kind: input, shape index: {}]
  %s3 = inlined_call_operand.vmem [shape: bf16[128], index: 3, kind: input, shape index: {}]
  %s4 = inlined_call_operand.vmem [shape: bf16[128], index: 4, kind: input, shape index: {}]
  %s5 = inlined_call_operand.vmem [shape: f32[8,128], index: 5, kind: output, shape index: {}]
  %s6 = sld [smem:[#allocation0]]
  $region26: #{assembled_classifier_forward.2} parent=0
    _
  %s8 = ssub.s32 1, %s6
  %s9 = scalar_select 0, %s8, %s6
  %v10 = vstv %s2
  %v11 = vunpack.i.l.bf16 %v10
  %v13 = vunpack.i.h.bf16 %v10
  $region1: #{assembled_classifier_forward.2} parent=0
    #allocation7 [shape = 'u8[8192]{0}', space=vmem, size = 0x2000, dematerialized = true, scoped, tag = 'FusionAdapter Buffer %fusion.1 = bf16[32,128]{1,0:T(8,128)(2,1)} fusion(%param_1.12, %param_2.7, %param_3.5, %param_4.2), kind=kLoop, calls=%fused_computation.2.clone, metadata={op_name="jit(assembled_classifier_forward)/concatenate" stack_frame_id=14}']
    // Predicated region
    $region2: #{assembled_classifier_forward.2} parent=1 // pred_check
      _
    $region3: #{assembled_classifier_forward.2} parent=1 // pred_check_branch
      %16 = sbr.rel (0) target = $region5
    $region4: #{assembled_classifier_forward.2} parent=1 // pred_region
      _
    $region5: #{assembled_classifier_forward.2} parent=1 // pred_fallthru
      _
    // Predicated region
    $region6: #{assembled_classifier_forward.2} parent=1 // pred_check
      _
    $region7: #{assembled_classifier_forward.2} parent=1 // pred_check_branch
      %18 = sbr.rel (0) target = $region9
    $region8: #{assembled_classifier_forward.2} parent=1 // pred_region
      _
    $region9: #{assembled_classifier_forward.2} parent=1 // pred_fallthru
      _
    // Predicated region
    $region10: #{assembled_classifier_forward.2} parent=1 // pred_check
      _
    $region11: #{assembled_classifier_forward.2} parent=1 // pred_check_branch
      %20 = sbr.rel (0) target = $region13
    $region12: #{assembled_classifier_forward.2} parent=1 // pred_region
      _
    $region13: #{assembled_classifier_forward.2} parent=1 // pred_fallthru
      _
    // Predicated region
    $region14: #{assembled_classifier_forward.2} parent=1 // pred_check
      _
    $region15: #{assembled_classifier_forward.2} parent=1 // pred_check_branch
      %22 = sbr.rel (0) target = $region17
    $region16: #{assembled_classifier_forward.2} parent=1 // pred_region
      _
    $region17: #{assembled_classifier_forward.2} parent=1 // pred_fallthru
      _
    %s24 = sor.u32 255, 127
    %s25 = sand.u32 %s24, 85
    %s26 = sshrl.u32 %s25, 1
    %s27 = sor.u32 %s25, %s26
    %s28 = sand.u32 51, %s27
    %s29 = sshrl.u32 %s28, 2
    %s30 = sor.u32 %s28, %s29
    %s31 = sand.u32 15, %s30
    %v32 = vld [vmem:[%s1] sm:%s31]
    %v33 = vunpack.c.l.bf16 %v32
    %v34 = vunpack.c.h.bf16 %v32
    %v35 = vlaneseq
    %v36 = vand.u32 %v35, 127
    %vm38 = vcmp.lt.s32.totalorder %v36, 64
    %v39 = vsel %vm38, %v33, %v11
    %v40 = vld [vmem:[%s3] ss:$0 sm:$0xff]
    %v41 = vunpack.i.l.bf16 %v40
    %v43 = vunpack.i.h.bf16 %v40
    %v45 = vld [vmem:[%s4] ss:$0 sm:$0xff]
    %v46 = vunpack.i.l.bf16 %v45
    %v48 = vunpack.i.h.bf16 %v45
    %50 = xla_tuple %v39, %v46
    %51 = xla_tuple %50
    %v52 = vmax.f32 %v39, %v46
    %53 = xla_tuple %v52
    %54 = xla_tuple %v52, %v41
    %55 = xla_tuple %54
    %v56 = vmax.f32 %v52, %v41
    %57 = xla_tuple %v56
    %v58 = vpack.c.bf16 0.0, %v56
    %s60 = ssub.s32 16, 1
    %61 = vst [vmem:[#allocation7] sm:%s60] %v58
    %s62 = scalar_lea.vmem %s1, 4
    %s64 = sor.u32 255, 127
    %s65 = sand.u32 %s64, 85
    %s66 = sshrl.u32 %s65, 1
    %s67 = sor.u32 %s65, %s66
    %s68 = sand.u32 51, %s67
    %s69 = sshrl.u32 %s68, 2
    %s70 = sor.u32 %s68, %s69
    %s71 = sand.u32 15, %s70
    %v72 = vld [vmem:[%s62] sm:%s71]
    %v73 = vunpack.c.l.bf16 %v72
    %v74 = vunpack.c.h.bf16 %v72
    %v75 = vlaneseq
    %v76 = vand.u32 %v75, 127
    %vm78 = vcmp.lt.s32.totalorder %v76, 64
    %v79 = vsel %vm78, %v73, %v11
    %80 = xla_tuple %v79, %v46
    %81 = xla_tuple %80
    %v82 = vmax.f32 %v79, %v46
    %83 = xla_tuple %v82
    %84 = xla_tuple %v82, %v41
    %85 = xla_tuple %84
    %v86 = vmax.f32 %v82, %v41
    %87 = xla_tuple %v86
    %s88 = scalar_lea.vmem [#allocation7], 4
    %v89 = vpack.c.bf16 0.0, %v86
    %s91 = ssub.s32 16, 1
    %92 = vst [vmem:[%s88] sm:%s91] %v89
    %s93 = scalar_lea.vmem %s1, 8
    %s95 = sor.u32 255, 127
    %s96 = sand.u32 %s95, 85
    %s97 = sshrl.u32 %s96, 1
    %s98 = sor.u32 %s96, %s97
    %s99 = sand.u32 51, %s98
    %s100 = sshrl.u32 %s99, 2
    %s101 = sor.u32 %s99, %s100
    %s102 = sand.u32 15, %s101
    %v103 = vld [vmem:[%s93] sm:%s102]
    %v104 = vunpack.c.l.bf16 %v103
    %v105 = vunpack.c.h.bf16 %v103
    %v106 = vlaneseq
    %v107 = vand.u32 %v106, 127
    %vm109 = vcmp.lt.s32.totalorder %v107, 64
    %v110 = vsel %vm109, %v104, %v11
    %111 = xla_tuple %v110, %v46
    %112 = xla_tuple %111
    %v113 = vmax.f32 %v110, %v46
    %114 = xla_tuple %v113
    %115 = xla_tuple %v113, %v41
    %116 = xla_tuple %115
    %v117 = vmax.f32 %v113, %v41
    %118 = xla_tuple %v117
    %s119 = scalar_lea.vmem [#allocation7], 8
    %v120 = vpack.c.bf16 0.0, %v117
    %s122 = ssub.s32 16, 1
    %123 = vst [vmem:[%s119] sm:%s122] %v120
    %s124 = scalar_lea.vmem %s1, 12
    %s126 = sor.u32 255, 127
    %s127 = sand.u32 %s126, 85
    %s128 = sshrl.u32 %s127, 1
    %s129 = sor.u32 %s127, %s128
    %s130 = sand.u32 51, %s129
    %s131 = sshrl.u32 %s130, 2
    %s132 = sor.u32 %s130, %s131
    %s133 = sand.u32 15, %s132
    %v134 = vld [vmem:[%s124] sm:%s133]
    %v135 = vunpack.c.l.bf16 %v134
    %v136 = vunpack.c.h.bf16 %v134
    %v137 = vlaneseq
    %v138 = vand.u32 %v137, 127
    %vm140 = vcmp.lt.s32.totalorder %v138, 64
    %v141 = vsel %vm140, %v135, %v11
    %142 = xla_tuple %v141, %v46
    %143 = xla_tuple %142
    %v144 = vmax.f32 %v141, %v46
    %145 = xla_tuple %v144
    %146 = xla_tuple %v144, %v41
    %147 = xla_tuple %146
    %v148 = vmax.f32 %v144, %v41
    %149 = xla_tuple %v148
    %s150 = scalar_lea.vmem [#allocation7], 12
    %v151 = vpack.c.bf16 0.0, %v148
    %s153 = ssub.s32 16, 1
    %154 = vst [vmem:[%s150] sm:%s153] %v151
    %v155 = vld [vmem:[%s0] sm:$0xf]
    %v156 = vld [vmem:[%s0 + $0x8] sm:$0xf]
    %v157 = vld [vmem:[%s0 + $0x10] sm:$0xf]
    %v158 = vld [vmem:[%s0 + $0x18] sm:$0xf]
    %v159 = vld [vmem:[%s0 + $0x20] sm:$0xf]
    %v160 = vld [vmem:[%s0 + $0x28] sm:$0xf]
    %v161 = vld [vmem:[%s0 + $0x30] sm:$0xf]
    %v162 = vld [vmem:[%s0 + $0x38] sm:$0xf]
    %v163 = vld [vmem:[%s0 + $0x40] sm:$0xf]
    %v164 = vld [vmem:[%s0 + $0x48] sm:$0xf]
    %v165 = vld [vmem:[%s0 + $0x50] sm:$0xf]
    %v166 = vld [vmem:[%s0 + $0x58] sm:$0xf]
    %v167 = vld [vmem:[%s0 + $0x60] sm:$0xf]
    %v168 = vld [vmem:[%s0 + $0x68] sm:$0xf]
    %v169 = vld [vmem:[%s0 + $0x70] sm:$0xf]
    %v170 = vld [vmem:[%s0 + $0x78] sm:$0xf]
    %v171 = vld [vmem:[%s0 + $0x4] sm:$0xf]
    %v172 = vld [vmem:[%s0 + $0xc] sm:$0xf]
    %v173 = vld [vmem:[%s0 + $0x14] sm:$0xf]
    %v174 = vld [vmem:[%s0 + $0x1c] sm:$0xf]
    %v175 = vld [vmem:[%s0 + $0x24] sm:$0xf]
    %v176 = vld [vmem:[%s0 + $0x2c] sm:$0xf]
    %v177 = vld [vmem:[%s0 + $0x34] sm:$0xf]
    %v178 = vld [vmem:[%s0 + $0x3c] sm:$0xf]
    %v179 = vld [vmem:[%s0 + $0x44] sm:$0xf]
    %v180 = vld [vmem:[%s0 + $0x4c] sm:$0xf]
    %v181 = vld [vmem:[%s0 + $0x54] sm:$0xf]
    %v182 = vld [vmem:[%s0 + $0x5c] sm:$0xf]
    %v183 = vld [vmem:[%s0 + $0x64] sm:$0xf]
    %v184 = vld [vmem:[%s0 + $0x6c] sm:$0xf]
    %v185 = vld [vmem:[%s0 + $0x74] sm:$0xf]
    %v186 = vld [vmem:[%s0 + $0x7c] sm:$0xf]
    %v187 = vlaneseq
    %v188 = vand.u32 %v187, 127
    %v189 = vld [vmem:[#allocation7] sm:$0xf]
    %v190 = vld [vmem:[#allocation7 + $0x4] sm:$0xf]
    %v191 = vld [vmem:[#allocation7 + $0x8] sm:$0xf]
    %v192 = vld [vmem:[#allocation7 + $0xc] sm:$0xf]
    %v193 = vunpack.c.l.bf16 %v189
    %v194 = vunpack.c.l.bf16 %v190
    %v195 = vunpack.c.l.bf16 %v191
    %v196 = vunpack.c.l.bf16 %v192
    %v197 = vadd.f32 %v193, %v194
    %v198 = vrot.slane %v197, 4
    %v199 = vadd.f32 %v197, %v198
    %v200 = vrot.slane %v199, 2
    %v201 = vadd.f32 %v199, %v200
    %v202 = vrot.slane %v201, 1
    %v203 = vadd.f32 %v201, %v202
    %v204 = vadd.f32 %v195, %v196
    %v205 = vrot.slane %v204, 4
    %v206 = vadd.f32 %v204, %v205
    %v207 = vrot.slane %v206, 2
    %v208 = vadd.f32 %v206, %v207
    %v209 = vrot.slane %v208, 1
    %v210 = vadd.f32 %v208, %v209
    %v211 = vrcp.pop 16.0
    %v212 = vmul.f32 16.0, %v211
    %v213 = vsub.f32 1.0, %v212
    %v214 = vmul.f32 %v211, %v213
    %v215 = vadd.f32 %v211, %v214
    %vm216 = vweird.f32 %v211
    %v217 = vsel %vm216, %v211, %v215
    %v218 = vmul.f32 %v203, %v217
    %v219 = vmul.f32 %v210, %v217
    %v220 = vpack.c.bf16 %v218, %v218
    %v221 = vpack.c.bf16 %v219, %v219
    %v224 = vunpack.c.l.b16 %v220
    %v225 = vunpack.c.l.b16 %v221
    %vm226 = vcmask 1041409
    %v227 = vsel %vm226, %v225, %v224
    %v228 = vpack.c.b16 %v227, %v227
    %v246 = vunpack.c.l.b16 %v155
    %v247 = vunpack.c.l.b16 %v156
    %v248 = vunpack.c.l.b16 %v157
    %v249 = vunpack.c.l.b16 %v158
    %v250 = vunpack.c.l.b16 %v159
    %v251 = vunpack.c.l.b16 %v160
    %v252 = vunpack.c.l.b16 %v161
    %v253 = vunpack.c.l.b16 %v162
    %v254 = vunpack.c.l.b16 %v163
    %v255 = vunpack.c.l.b16 %v164
    %v256 = vunpack.c.l.b16 %v165
    %v257 = vunpack.c.l.b16 %v166
    %v258 = vunpack.c.l.b16 %v167
    %v259 = vunpack.c.l.b16 %v168
    %v260 = vunpack.c.l.b16 %v169
    %v261 = vunpack.c.l.b16 %v170
    %v262 = vpack.c.b16 %v247, %v246
    %v263 = vpack.c.b16 %v249, %v248
    %v264 = vpack.c.b16 %v251, %v250
    %v265 = vpack.c.b16 %v253, %v252
    %v266 = vpack.c.b16 %v255, %v254
    %v267 = vpack.c.b16 %v257, %v256
    %v268 = vpack.c.b16 %v259, %v258
    %v269 = vpack.c.b16 %v261, %v260
    %278 = vmatpush.bf16.msra.mxu0 %v269
    %279 = vmatpush.bf16.msra.mxu0 %v268
    %280 = vmatpush.bf16.msra.mxu0 %v267
    %281 = vmatpush.bf16.msra.mxu0 %v266
    %282 = vmatpush.bf16.msra.mxu0 %v265
    %283 = vmatpush.bf16.msra.mxu0 %v264
    %284 = vmatpush.bf16.msra.mxu0 %v263
    %285 = vmatpush.bf16.msra.mxu0 %v262
    %286 = vmatmul.bf16.gmra.mxu0 %v228
    %v287 = vpop.f32.mrf.mxu0
    %v288 = vadd.f32 0.0, %v287
    %v289 = vpop.f32.mrf.mxu0
    %290 = vdwg.mxu0
    %v291 = vmul.f32 %v288, %v288
    %v292 = vmul.f32 %v288, %v291
    %v293 = vmul.f32 %v292, 0.044715
    %v294 = vadd.f32 %v288, %v293
    %v295 = vmul.f32 %v294, 0.7978846
    %v296 = vtanh.pop %v295
    %v297 = vadd.f32 %v296, 1.0
    %v298 = vmul.f32 %v297, 0.5
    %v299 = vmul.f32 %v288, %v298
    %vm300 = vcmp.eq.s32.totalorder %v188, 32
    %v301 = vsel %vm300, 1, 0
    %vm302 = vcmp.eq.s32.totalorder %v301, 1
    %v303 = vsel %vm302, 1.0, %v299
    %v304 = vpack.c.bf16 %v303, %v303
    %v321 = vunpack.c.l.b16 %v171
    %v322 = vunpack.c.l.b16 %v172
    %v323 = vunpack.c.l.b16 %v173
    %v324 = vunpack.c.l.b16 %v174
    %v325 = vunpack.c.l.b16 %v175
    %v326 = vunpack.c.l.b16 %v176
    %v327 = vunpack.c.l.b16 %v177
    %v328 = vunpack.c.l.b16 %v178
    %v329 = vunpack.c.l.b16 %v179
    %v330 = vunpack.c.l.b16 %v180
    %v331 = vunpack.c.l.b16 %v181
    %v332 = vunpack.c.l.b16 %v182
    %v333 = vunpack.c.l.b16 %v183
    %v334 = vunpack.c.l.b16 %v184
    %v335 = vunpack.c.l.b16 %v185
    %v336 = vunpack.c.l.b16 %v186
    %v337 = vpack.c.b16 %v322, %v321
    %v338 = vpack.c.b16 %v324, %v323
    %v339 = vpack.c.b16 %v326, %v325
    %v340 = vpack.c.b16 %v328, %v327
    %v341 = vpack.c.b16 %v330, %v329
    %v342 = vpack.c.b16 %v332, %v331
    %v343 = vpack.c.b16 %v334, %v333
    %v344 = vpack.c.b16 %v336, %v335
    %353 = vmatpush.bf16.msra.mxu0 %v344
    %354 = vmatpush.bf16.msra.mxu0 %v343
    %355 = vmatpush.bf16.msra.mxu0 %v342
    %356 = vmatpush.bf16.msra.mxu0 %v341
    %357 = vmatpush.bf16.msra.mxu0 %v340
    %358 = vmatpush.bf16.msra.mxu0 %v339
    %359 = vmatpush.bf16.msra.mxu0 %v338
    %360 = vmatpush.bf16.msra.mxu0 %v337
    %361 = vmatmul.bf16.gmra.mxu0 %v304
    %v362 = vpop.f32.mrf.mxu0
    %v363 = vadd.f32 0.0, %v362
    %v364 = vpop.f32.mrf.mxu0
    %365 = vdwg.mxu0
    %366 = vst [vmem:[%s5] sm:$0xff] 0.0
    %367 = vst [vmem:[%s5] sm:$0x3] %v363
    // Predicated region
    $region18: #{assembled_classifier_forward.2} parent=1 // pred_check
      _
    $region19: #{assembled_classifier_forward.2} parent=1 // pred_check_branch
      %369 = sbr.rel (0) target = $region21
    $region20: #{assembled_classifier_forward.2} parent=1 // pred_region
      _
    $region21: #{assembled_classifier_forward.2} parent=1 // pred_fallthru
      _
    // Predicated region
    $region22: #{assembled_classifier_forward.2} parent=1 // pred_check
      _
    $region23: #{assembled_classifier_forward.2} parent=1 // pred_check_branch
      %371 = sbr.rel (0) target = $region25
    $region24: #{assembled_classifier_forward.2} parent=1 // pred_region
      _
    $region25: #{assembled_classifier_forward.2} parent=1 // pred_fallthru
      _

</llo_original>
